<compile_context>
chip_gen: v6e
topology: v6e:2x2x1
jax: 0.10.0
libtpu: 0.0.40
codegen_flags: <defaults>
</compile_context>

<pallas_src>
import functools

import jax
import jax.numpy as jnp
from jax.experimental import pallas as pl
from jax.experimental.pallas import tpu as pltpu


def _round_up(v, m):
    return (v + m - 1) // m * m


def _vmem_budget_and_limit():
    """Generation-aware (streaming budget, scoped-VMEM limit) in bytes.

    v5e/v6e have 128 MiB physical VMEM -> be generous.  v7x has only 64 MiB per
    TensorCore (2 TCs/chip) -> stay conservative.  Falls back to the conservative
    setting if the hardware query is unavailable.
    """
    cap = 0
    try:
        info = pltpu.get_tpu_info()
        cap = int(getattr(info, "vmem_capacity_bytes", 0) or 0)
    except Exception:  # best-effort query only
        cap = 0
    if cap >= 96 * 1024 * 1024:          # v5e / v6e (128 MiB)
        return 44 << 20, 64 << 20
    return 20 << 20, 32 << 20            # v7x (64 MiB/TC) or unknown


def _pick_node_tile(n, c, k, *, max_tile=8192, budget_bytes=20 << 20):
    """Choose the node (lane) tile first, then pad N up to a multiple of it."""
    # VMEM bytes live per node column (the pipeline double-buffers every streamed
    # operand): bf16 xj (2*K*C*2B) + f32 x (2*C*4B) + f32 out (2*C*4B).
    per_col = 2 * k * c * 2 + 2 * c * 4 + 2 * c * 4
    fixed = 2 * c * c * 4 + c * 4                     # resident W1-W2, W2, bias
    cap = max(128, (budget_bytes - fixed) // per_col)
    cap = max(128, min(max_tile, cap) // 128 * 128)
    n_ceil = _round_up(n, 128)
    if n_ceil >= 256:
        # keep >= 2 grid steps so the 'parallel' axis can be sharded across TCs
        cap = min(cap, max(128, (n_ceil // 2) // 128 * 128))
    tn = min(cap, n_ceil)
    n_pad = _round_up(n, tn)
    return tn, n_pad


def _edgeconv_kernel(x_ref, xj_ref, w1m_ref, w2_ref, b_ref, o_ref):
    # x_ref  : (C, TN)      center features, channels-first (nodes on lanes), f32
    # xj_ref : (K, C, TN)   gathered neighbour features (incl. 1e6 pad-row picks), bf16
    # w1m_ref: (C, C)       W1 - W2   (folded center weight), f32
    # w2_ref : (C, C)       W2        (neighbour weight), f32
    # b_ref  : (C, 1)       bias, f32
    # o_ref  : (C, TN)      aggr + residual, f32
    center = x_ref[...]                                                    # (C, TN)
    w2 = w2_ref[...]

    # center contribution of the folded 1x1 conv: (W1 - W2) @ x + b  (lane-dense)
    part_i = jnp.dot(w1m_ref[...], center,
                     preferred_element_type=jnp.float32) + b_ref[...]      # (C, TN)

    k_neigh = xj_ref.shape[0]
    acc = None
    for k in range(k_neigh):                 # K is small & static -> fully unrolled
        xj_k = xj_ref[k].astype(jnp.float32)                               # bf16 -> f32
        pj = jnp.dot(w2, xj_k, preferred_element_type=jnp.float32)         # (C, TN)
        hk = jnp.maximum(part_i + pj, 0.0)                                 # relu
        acc = hk if acc is None else jnp.maximum(acc, hk)                  # max over k

    o_ref[...] = (acc + center).astype(o_ref.dtype)                        # residual


@functools.partial(jax.jit, static_argnames=("max_node_tile",))
def res_graph_block1d(x, edge_index, conv_weight, conv_bias, *, max_node_tile=8192):
    """
    x:           (N, C)    float32
    edge_index:  (2, N, K) int32 -- edge_index[0][n, j] = j-th neighbour of node n
                 (index N selects the 1e6 padding row, as in the PyTorch code)
    conv_weight: (C, 2C)   float32  (torch Conv1d weight (C, 2C, 1) squeezed)
    conv_bias:   (C,)      float32
    returns:     ((N, C) float32, edge_index)
    """
    N, C = x.shape
    K = edge_index.shape[-1]

    budget_bytes, vmem_limit = _vmem_budget_and_limit()
    tn, n_pad = _pick_node_tile(N, C, K, max_tile=max_node_tile,
                                budget_bytes=budget_bytes)

    # ---- glue (gather + parameter plumbing) in plain JAX ---------------------------
    # sentinel row of 1e6 at index N (matches torch.cat((x, zeros_like(x[:1]) + 1e6)))
    s_pts_cf = jnp.concatenate(
        [x.T, jnp.full((C, 1), 1000000.0, dtype=x.dtype)], axis=1)       # (C, N+1)
    # stream the gathered neighbours in bf16 (halves the dominant HBM traffic);
    # W2 / x / bias / accumulation / output stay f32.
    s_pts_bf = s_pts_cf.astype(jnp.bfloat16)

    # pad the *index* array (with the sentinel index N) rather than padding the big
    # gathered tensor afterwards
    idx = edge_index[0]                                                  # (N, K)
    idx_pad = jnp.pad(idx, ((0, n_pad - N), (0, 0)), constant_values=N)  # (n_pad, K)
    idx_kn = idx_pad.T                                                   # (K, n_pad)

    # gather channels-first directly into the (K, C, n_pad) lane-dense layout the
    # kernel consumes — single materialization, no transpose / pad passes.
    xj_kcn = jax.vmap(lambda ik: jnp.take(s_pts_bf, ik, axis=1))(idx_kn)  # (K,C,n_pad)

    x_cf = jnp.pad(x.T, ((0, 0), (0, n_pad - N)))                        # (C, n_pad)

    # fold the (x_j - x_i) subtraction into the weights:
    #   relu(W1 x_i + W2 (x_j - x_i) + b) == relu((W1 - W2) x_i + W2 x_j + b)
    w1 = conv_weight[:, :C]
    w2 = conv_weight[:, C:]
    w1m = w1 - w2                                                        # (C, C)
    b = conv_bias.reshape(C, 1)

    cost = pl.CostEstimate(
        flops=2 * (K + 1) * C * C * n_pad,
        transcendentals=0,
        bytes_accessed=(K * C * n_pad * 2            # bf16 neighbour stream
                        + 2 * C * n_pad * 4          # f32 x in + out
                        + 2 * C * C * 4 + C * 4),    # weights + bias
    )

    # ---- hot path in Pallas ---------------------------------------------------------
    out_cf = pl.pallas_call(
        _edgeconv_kernel,
        out_shape=jax.ShapeDtypeStruct((C, n_pad), x.dtype),
        grid=(n_pad // tn,),
        in_specs=[
            pl.BlockSpec((C, tn), lambda i: (0, i)),                # x     (lane-dense)
            pl.BlockSpec((K, C, tn), lambda i: (0, 0, i)),          # x_j   (bf16 stream)
            pl.BlockSpec((C, C), lambda i: (0, 0)),                 # W1-W2 (resident)
            pl.BlockSpec((C, C), lambda i: (0, 0)),                 # W2    (resident)
            pl.BlockSpec((C, 1), lambda i: (0, 0)),                 # bias  (resident)
        ],
        out_specs=pl.BlockSpec((C, tn), lambda i: (0, i)),
        compiler_params=pltpu.CompilerParams(
            dimension_semantics=("parallel",),
            vmem_limit_bytes=vmem_limit,
        ),
        cost_estimate=cost,
    )(x_cf, xj_kcn, w1m, w2, b)

    # back to the module's (N, C) layout (cheap: 1/K of the neighbour stream)
    out = out_cf[:, :N].T
    return out, edge_index


def _reference(x, edge_index, conv_weight, conv_bias):
    # pure-JAX mirror of the PyTorch forward, for correctness checking
    N, C = x.shape
    s_pts = jnp.concatenate([x, jnp.full((1, C), 1000000.0, x.dtype)], axis=0)
    x_j = s_pts[edge_index[0]]                                      # (N, K, C)
    x_i = jnp.broadcast_to(x[:, None, :], x_j.shape)
    feat = jnp.concatenate([x_i, x_j - x_i], axis=-1)               # (N, K, 2C)
    h = jnp.maximum(feat @ conv_weight.T + conv_bias, 0.0)          # (N, K, C)
    return h.max(axis=1) + x


if __name__ == "__main__":
    key = jax.random.PRNGKey(0)
    k_x, k_e, k_w, k_b = jax.random.split(key, 4)

    N, C, K = 200, 8, 9        # small shapes; k=9 matches the module default
    x = jax.random.normal(k_x, (N, C), dtype=jnp.float32)

    # neighbour indices in [0, N]; index N selects the 1e6 padding row
    neigh = jax.random.randint(k_e, (N, K), 0, N + 1, dtype=jnp.int32)
    neigh = neigh.at[3].set(N)  # one node whose neighbours are ALL the pad row
    centers = jnp.broadcast_to(jnp.arange(N, dtype=jnp.int32)[:, None], (N, K))
    edge_index = jnp.stack([neigh, centers], axis=0)                # (2, N, K)

    # deterministic parameter init: Conv1d(2C -> C, kernel=1, bias=True)
    conv_weight = (jax.random.normal(k_w, (C, 2 * C), dtype=jnp.float32)
                   * (1.0 / jnp.sqrt(2.0 * C)))
    conv_bias = jax.random.normal(k_b, (C,), dtype=jnp.float32) * 0.1

    out, ei_out = res_graph_block1d(x, edge_index, conv_weight, conv_bias)
    out = jax.block_until_ready(out)

    ref = _reference(x, edge_index, conv_weight, conv_bias)
    assert out.shape == (N, C)
    # bf16 neighbour stream -> ~0.4% relative quantization on the x_j contribution
    assert jnp.allclose(out, ref, rtol=1e-2, atol=1e-2), "mismatch vs reference"
    assert (ei_out == edge_index).all()

    print("KERNEL_OK")
</pallas_src>

<mosaic_0001>
module attributes {stable_mosaic.version = 11 : i64} {
  func.func @_edgeconv_kernel(%arg0: i32, %arg1: memref<8x128xf32, #tpu.memory_space<vmem>>, %arg2: memref<9x8x128xbf16, #tpu.memory_space<vmem>>, %arg3: memref<8x8xf32, #tpu.memory_space<vmem>>, %arg4: memref<8x8xf32, #tpu.memory_space<vmem>>, %arg5: memref<8x1xf32, #tpu.memory_space<vmem>>, %arg6: memref<8x128xf32, #tpu.memory_space<vmem>>) attributes {dimension_semantics = [#tpu.dimension_semantics<parallel>], iteration_bounds = array<i64: 2>, scalar_prefetch = 0 : i64, scratch_operands = 0 : i64, tpu.core_type = #tpu.core_type<tc>, window_params = [{transform_indices = @transform_0, window_bounds = array<i64: 8, 128>}, {transform_indices = @transform_1, window_bounds = array<i64: 9, 8, 128>}, {pipeline_mode = #tpu.pipeline_mode<synchronous>, transform_indices = @transform_2, window_bounds = array<i64: 8, 8>}, {pipeline_mode = #tpu.pipeline_mode<synchronous>, transform_indices = @transform_3, window_bounds = array<i64: 8, 8>}, {pipeline_mode = #tpu.pipeline_mode<synchronous>, transform_indices = @transform_4, window_bounds = array<i64: 8, 1>}, {transform_indices = @transform_5, window_bounds = array<i64: 8, 128>}]} {
    %c0 = arith.constant 0 : index
    %c0_0 = arith.constant 0 : index
    %0 = vector.load %arg1[%c0, %c0_0] : memref<8x128xf32, #tpu.memory_space<vmem>>, vector<8x128xf32>
    %c0_1 = arith.constant 0 : index
    %c0_2 = arith.constant 0 : index
    %1 = vector.load %arg4[%c0_1, %c0_2] : memref<8x8xf32, #tpu.memory_space<vmem>>, vector<8x8xf32>
    %c0_3 = arith.constant 0 : index
    %c0_4 = arith.constant 0 : index
    %2 = vector.load %arg3[%c0_3, %c0_4] : memref<8x8xf32, #tpu.memory_space<vmem>>, vector<8x8xf32>
    %cst = arith.constant dense<0.000000e+00> : vector<8x128xf32>
    %3 = tpu.matmul %2, %0, %cst {dimension_numbers = #tpu.dot_dimension_numbers<[1], [0], [0], [1], [0, 0, 1, 1], [], []>} : vector<8x8xf32>, vector<8x128xf32>, vector<8x128xf32> -> vector<8x128xf32>
    %c0_5 = arith.constant 0 : index
    %c0_6 = arith.constant 0 : index
    %4 = vector.load %arg5[%c0_5, %c0_6] : memref<8x1xf32, #tpu.memory_space<vmem>>, vector<8x1xf32>
    %5 = vector.broadcast %4 : vector<8x1xf32> to vector<8x128xf32>
    %6 = arith.addf %3, %5 : vector<8x128xf32>
    %c0_7 = arith.constant 0 : index
    %c0_8 = arith.constant 0 : index
    %c0_9 = arith.constant 0 : index
    %7 = vector.load %arg2[%c0_7, %c0_8, %c0_9] : memref<9x8x128xbf16, #tpu.memory_space<vmem>>, vector<1x8x128xbf16>
    %8 = vector.shape_cast %7 : vector<1x8x128xbf16> to vector<8x128xbf16>
    %9 = arith.extf %8 : vector<8x128xbf16> to vector<8x128xf32>
    %cst_10 = arith.constant dense<0.000000e+00> : vector<8x128xf32>
    %10 = tpu.matmul %1, %9, %cst_10 {dimension_numbers = #tpu.dot_dimension_numbers<[1], [0], [0], [1], [0, 0, 1, 1], [], []>} : vector<8x8xf32>, vector<8x128xf32>, vector<8x128xf32> -> vector<8x128xf32>
    %11 = arith.addf %6, %10 : vector<8x128xf32>
    %cst_11 = arith.constant 0.000000e+00 : f32
    %12 = vector.broadcast %cst_11 : f32 to vector<8x128xf32>
    %13 = arith.maximumf %11, %12 : vector<8x128xf32>
    %c1 = arith.constant 1 : index
    %c0_12 = arith.constant 0 : index
    %c0_13 = arith.constant 0 : index
    %14 = vector.load %arg2[%c1, %c0_12, %c0_13] : memref<9x8x128xbf16, #tpu.memory_space<vmem>>, vector<1x8x128xbf16>
    %15 = vector.shape_cast %14 : vector<1x8x128xbf16> to vector<8x128xbf16>
    %16 = arith.extf %15 : vector<8x128xbf16> to vector<8x128xf32>
    %cst_14 = arith.constant dense<0.000000e+00> : vector<8x128xf32>
    %17 = tpu.matmul %1, %16, %cst_14 {dimension_numbers = #tpu.dot_dimension_numbers<[1], [0], [0], [1], [0, 0, 1, 1], [], []>} : vector<8x8xf32>, vector<8x128xf32>, vector<8x128xf32> -> vector<8x128xf32>
    %18 = arith.addf %6, %17 : vector<8x128xf32>
    %cst_15 = arith.constant 0.000000e+00 : f32
    %19 = vector.broadcast %cst_15 : f32 to vector<8x128xf32>
    %20 = arith.maximumf %18, %19 : vector<8x128xf32>
    %21 = arith.maximumf %13, %20 : vector<8x128xf32>
    %c2 = arith.constant 2 : index
    %c0_16 = arith.constant 0 : index
    %c0_17 = arith.constant 0 : index
    %22 = vector.load %arg2[%c2, %c0_16, %c0_17] : memref<9x8x128xbf16, #tpu.memory_space<vmem>>, vector<1x8x128xbf16>
    %23 = vector.shape_cast %22 : vector<1x8x128xbf16> to vector<8x128xbf16>
    %24 = arith.extf %23 : vector<8x128xbf16> to vector<8x128xf32>
    %cst_18 = arith.constant dense<0.000000e+00> : vector<8x128xf32>
    %25 = tpu.matmul %1, %24, %cst_18 {dimension_numbers = #tpu.dot_dimension_numbers<[1], [0], [0], [1], [0, 0, 1, 1], [], []>} : vector<8x8xf32>, vector<8x128xf32>, vector<8x128xf32> -> vector<8x128xf32>
    %26 = arith.addf %6, %25 : vector<8x128xf32>
    %cst_19 = arith.constant 0.000000e+00 : f32
    %27 = vector.broadcast %cst_19 : f32 to vector<8x128xf32>
    %28 = arith.maximumf %26, %27 : vector<8x128xf32>
    %29 = arith.maximumf %21, %28 : vector<8x128xf32>
    %c3 = arith.constant 3 : index
    %c0_20 = arith.constant 0 : index
    %c0_21 = arith.constant 0 : index
    %30 = vector.load %arg2[%c3, %c0_20, %c0_21] : memref<9x8x128xbf16, #tpu.memory_space<vmem>>, vector<1x8x128xbf16>
    %31 = vector.shape_cast %30 : vector<1x8x128xbf16> to vector<8x128xbf16>
    %32 = arith.extf %31 : vector<8x128xbf16> to vector<8x128xf32>
    %cst_22 = arith.constant dense<0.000000e+00> : vector<8x128xf32>
    %33 = tpu.matmul %1, %32, %cst_22 {dimension_numbers = #tpu.dot_dimension_numbers<[1], [0], [0], [1], [0, 0, 1, 1], [], []>} : vector<8x8xf32>, vector<8x128xf32>, vector<8x128xf32> -> vector<8x128xf32>
    %34 = arith.addf %6, %33 : vector<8x128xf32>
    %cst_23 = arith.constant 0.000000e+00 : f32
    %35 = vector.broadcast %cst_23 : f32 to vector<8x128xf32>
    %36 = arith.maximumf %34, %35 : vector<8x128xf32>
    %37 = arith.maximumf %29, %36 : vector<8x128xf32>
    %c4 = arith.constant 4 : index
    %c0_24 = arith.constant 0 : index
    %c0_25 = arith.constant 0 : index
    %38 = vector.load %arg2[%c4, %c0_24, %c0_25] : memref<9x8x128xbf16, #tpu.memory_space<vmem>>, vector<1x8x128xbf16>
    %39 = vector.shape_cast %38 : vector<1x8x128xbf16> to vector<8x128xbf16>
    %40 = arith.extf %39 : vector<8x128xbf16> to vector<8x128xf32>
    %cst_26 = arith.constant dense<0.000000e+00> : vector<8x128xf32>
    %41 = tpu.matmul %1, %40, %cst_26 {dimension_numbers = #tpu.dot_dimension_numbers<[1], [0], [0], [1], [0, 0, 1, 1], [], []>} : vector<8x8xf32>, vector<8x128xf32>, vector<8x128xf32> -> vector<8x128xf32>
    %42 = arith.addf %6, %41 : vector<8x128xf32>
    %cst_27 = arith.constant 0.000000e+00 : f32
    %43 = vector.broadcast %cst_27 : f32 to vector<8x128xf32>
    %44 = arith.maximumf %42, %43 : vector<8x128xf32>
    %45 = arith.maximumf %37, %44 : vector<8x128xf32>
    %c5 = arith.constant 5 : index
    %c0_28 = arith.constant 0 : index
    %c0_29 = arith.constant 0 : index
    %46 = vector.load %arg2[%c5, %c0_28, %c0_29] : memref<9x8x128xbf16, #tpu.memory_space<vmem>>, vector<1x8x128xbf16>
    %47 = vector.shape_cast %46 : vector<1x8x128xbf16> to vector<8x128xbf16>
    %48 = arith.extf %47 : vector<8x128xbf16> to vector<8x128xf32>
    %cst_30 = arith.constant dense<0.000000e+00> : vector<8x128xf32>
    %49 = tpu.matmul %1, %48, %cst_30 {dimension_numbers = #tpu.dot_dimension_numbers<[1], [0], [0], [1], [0, 0, 1, 1], [], []>} : vector<8x8xf32>, vector<8x128xf32>, vector<8x128xf32> -> vector<8x128xf32>
    %50 = arith.addf %6, %49 : vector<8x128xf32>
    %cst_31 = arith.constant 0.000000e+00 : f32
    %51 = vector.broadcast %cst_31 : f32 to vector<8x128xf32>
    %52 = arith.maximumf %50, %51 : vector<8x128xf32>
    %53 = arith.maximumf %45, %52 : vector<8x128xf32>
    %c6 = arith.constant 6 : index
    %c0_32 = arith.constant 0 : index
    %c0_33 = arith.constant 0 : index
    %54 = vector.load %arg2[%c6, %c0_32, %c0_33] : memref<9x8x128xbf16, #tpu.memory_space<vmem>>, vector<1x8x128xbf16>
    %55 = vector.shape_cast %54 : vector<1x8x128xbf16> to vector<8x128xbf16>
    %56 = arith.extf %55 : vector<8x128xbf16> to vector<8x128xf32>
    %cst_34 = arith.constant dense<0.000000e+00> : vector<8x128xf32>
    %57 = tpu.matmul %1, %56, %cst_34 {dimension_numbers = #tpu.dot_dimension_numbers<[1], [0], [0], [1], [0, 0, 1, 1], [], []>} : vector<8x8xf32>, vector<8x128xf32>, vector<8x128xf32> -> vector<8x128xf32>
    %58 = arith.addf %6, %57 : vector<8x128xf32>
    %cst_35 = arith.constant 0.000000e+00 : f32
    %59 = vector.broadcast %cst_35 : f32 to vector<8x128xf32>
    %60 = arith.maximumf %58, %59 : vector<8x128xf32>
    %61 = arith.maximumf %53, %60 : vector<8x128xf32>
    %c7 = arith.constant 7 : index
    %c0_36 = arith.constant 0 : index
    %c0_37 = arith.constant 0 : index
    %62 = vector.load %arg2[%c7, %c0_36, %c0_37] : memref<9x8x128xbf16, #tpu.memory_space<vmem>>, vector<1x8x128xbf16>
    %63 = vector.shape_cast %62 : vector<1x8x128xbf16> to vector<8x128xbf16>
    %64 = arith.extf %63 : vector<8x128xbf16> to vector<8x128xf32>
    %cst_38 = arith.constant dense<0.000000e+00> : vector<8x128xf32>
    %65 = tpu.matmul %1, %64, %cst_38 {dimension_numbers = #tpu.dot_dimension_numbers<[1], [0], [0], [1], [0, 0, 1, 1], [], []>} : vector<8x8xf32>, vector<8x128xf32>, vector<8x128xf32> -> vector<8x128xf32>
    %66 = arith.addf %6, %65 : vector<8x128xf32>
    %cst_39 = arith.constant 0.000000e+00 : f32
    %67 = vector.broadcast %cst_39 : f32 to vector<8x128xf32>
    %68 = arith.maximumf %66, %67 : vector<8x128xf32>
    %69 = arith.maximumf %61, %68 : vector<8x128xf32>
    %c8 = arith.constant 8 : index
    %c0_40 = arith.constant 0 : index
    %c0_41 = arith.constant 0 : index
    %70 = vector.load %arg2[%c8, %c0_40, %c0_41] : memref<9x8x128xbf16, #tpu.memory_space<vmem>>, vector<1x8x128xbf16>
    %71 = vector.shape_cast %70 : vector<1x8x128xbf16> to vector<8x128xbf16>
    %72 = arith.extf %71 : vector<8x128xbf16> to vector<8x128xf32>
    %cst_42 = arith.constant dense<0.000000e+00> : vector<8x128xf32>
    %73 = tpu.matmul %1, %72, %cst_42 {dimension_numbers = #tpu.dot_dimension_numbers<[1], [0], [0], [1], [0, 0, 1, 1], [], []>} : vector<8x8xf32>, vector<8x128xf32>, vector<8x128xf32> -> vector<8x128xf32>
    %74 = arith.addf %6, %73 : vector<8x128xf32>
    %cst_43 = arith.constant 0.000000e+00 : f32
    %75 = vector.broadcast %cst_43 : f32 to vector<8x128xf32>
    %76 = arith.maximumf %74, %75 : vector<8x128xf32>
    %77 = arith.maximumf %69, %76 : vector<8x128xf32>
    %78 = arith.addf %77, %0 : vector<8x128xf32>
    %c0_44 = arith.constant 0 : index
    %c0_45 = arith.constant 0 : index
    %79 = vector.load %arg6[%c0_44, %c0_45] : memref<8x128xf32, #tpu.memory_space<vmem>>, vector<8x128xf32>
    tpu.vector_store %arg6[%c0_44, %c0_45], %78 {strides = array<i32>} : memref<8x128xf32, #tpu.memory_space<vmem>>, vector<8x128xf32>,
    return
  }
  func.func @transform_0(%arg0: i32) -> (i32, i32) {
    %c0_i32 = arith.constant 0 : i32
    %c0_i32_0 = arith.constant 0 : i32
    return %c0_i32, %arg0 : i32, i32
  }
  func.func @transform_1(%arg0: i32) -> (i32, i32, i32) {
    %c0_i32 = arith.constant 0 : i32
    %c0_i32_0 = arith.constant 0 : i32
    %c0_i32_1 = arith.constant 0 : i32
    return %c0_i32, %c0_i32_0, %arg0 : i32, i32, i32
  }
  func.func @transform_2(%arg0: i32) -> (i32, i32) {
    %c0_i32 = arith.constant 0 : i32
    %c0_i32_0 = arith.constant 0 : i32
    %c0_i32_1 = arith.constant 0 : i32
    return %c0_i32, %c0_i32_0 : i32, i32
  }
  func.func @transform_3(%arg0: i32) -> (i32, i32) {
    %c0_i32 = arith.constant 0 : i32
    %c0_i32_0 = arith.constant 0 : i32
    %c0_i32_1 = arith.constant 0 : i32
    return %c0_i32, %c0_i32_0 : i32, i32
  }
  func.func @transform_4(%arg0: i32) -> (i32, i32) {
    %c0_i32 = arith.constant 0 : i32
    %c0_i32_0 = arith.constant 0 : i32
    %c0_i32_1 = arith.constant 0 : i32
    return %c0_i32, %c0_i32_0 : i32, i32
  }
  func.func @transform_5(%arg0: i32) -> (i32, i32) {
    %c0_i32 = arith.constant 0 : i32
    %c0_i32_0 = arith.constant 0 : i32
    return %c0_i32, %arg0 : i32, i32
  }
}

</mosaic_0001>

<llo_original>
// kernel: res_graph_block1d.1
$region0: #{res_graph_block1d.1}
  #allocation0 [shape = 'u32[]', space=smem, size = 0x4, offset = 0x4, fixed_abs, tag = 'smem constant byte address 0x4 - core index']
  #allocation1 [shape = 'u32[144,128]{1,0:T(1,128)}', space=vmem, size = 0x12000, scoped, tag = 'internal scratch']
  %s0 = inlined_call_operand.vmem [shape: f32[8,256], index: 0, kind: input, shape index: {}]
  %s1 = inlined_call_operand.vmem [shape: bf16[9,8,256], index: 1, kind: input, shape index: {}]
  %s2 = inlined_call_operand.vmem [shape: f32[8,8], index: 2, kind: input, shape index: {}]
  %s3 = inlined_call_operand.vmem [shape: f32[8,8], index: 3, kind: input, shape index: {}]
  %s4 = inlined_call_operand.vmem [shape: f32[8,1], index: 4, kind: input, shape index: {}]
  %s5 = inlined_call_operand.vmem [shape: f32[8,256], index: 5, kind: output, shape index: {}]
  %s6 = sld [smem:[#allocation0]]
  $region94: #{res_graph_block1d.1} parent=0
    _
  %s8 = ssub.s32 1, %s6
  %s9 = scalar_select 0, %s8, %s6
  $region1: #{res_graph_block1d.1} parent=0
    #allocation2 [shape = 'u8[36864]{0}', space=vmem, size = 0x9000, scoped, tag = 'input window, operand 1']
    loop: start=0, step=1, limit=4
    $region2: #{res_graph_block1d.1} parent=1 // loop_pre_header
      _
    $region3: #{res_graph_block1d.1} parent=1 // loop_header
      %s11 = sphi 0, %s15
      %p12 = scmp.ge.s32.totalorder %s11, 4
      %s21 = sphi 0, %s23
      %s24 = sphi 0, %s21
      %s25 = sphi 0, %s24
      %s41 = sphi 0, %s25
      %s47 = sphi 0, %s49
      %s50 = sphi 0, %s47
      %s51 = sphi 0, %s50
      %s67 = sphi 0, %s51
      %s71 = sphi 0, %s71
      %s73 = sphi 0, %s71
      %s74 = sphi 0, %s73
      %s88 = sphi 0, %s74
      %s92 = sphi 0, %s92
      %s94 = sphi 0, %s92
      %s95 = sphi 0, %s94
      %s109 = sphi 0, %s95
      %s113 = sphi 0, %s113
      %s115 = sphi 0, %s113
      %s116 = sphi 0, %s115
      %s130 = sphi 0, %s116
      %s136 = sphi 0, %s138
      %s139 = sphi 0, %s136
      %s140 = sphi 0, %s139
      %s156 = sphi 0, %s140
    $region4: #{res_graph_block1d.1} parent=1 // loop_header_branch
      %14 = sbr.rel (%p12) target = $region8
    $region5: #{res_graph_block1d.1} parent=1 // loop_body
      %s16 = ssub.s32 %s11, 1
      %s17 = ssub.s32 %s11, 2
      %s18 = sadd.s32 %s11, 1
      %s19 = ssub.s32 %s11, %s18
      %p20 = scmp.eq.s32.totalorder %s19, 0
      %s22 = sadd.s32 %s21, 1
      %s23 = scalar_select %p20, %s21, %s22
      %p26 = pneg %p20
      %p27 = scmp.eq.s32.totalorder %s11, 1
      %p28 = por %p26, %p27
      %p29 = scmp.ne.s32.totalorder %s21, %s24
      %p30 = scmp.eq.s32.totalorder %s11, 0
      %p31 = por %p29, %p30
      %p32 = scmp.ne.s32.totalorder %s21, %s24
      %p33 = scmp.eq.s32.totalorder %s16, 1
      %p34 = por %p32, %p33
      %p35 = scmp.ne.s32.totalorder %s24, %s25
      %p36 = scmp.eq.s32.totalorder %s16, 0
      %p37 = por %p35, %p36
      %p38 = scmp.ne.s32.totalorder %s24, %s25
      %p39 = scmp.eq.s32.totalorder %s17, 1
      %p40 = por %p38, %p39
      %p42 = scmp.ne.s32.totalorder %s25, %s41
      %p43 = scmp.eq.s32.totalorder %s17, 0
      %p44 = por %p42, %p43
      %s45 = ssub.s32 %s11, %s18
      %p46 = scmp.eq.s32.totalorder %s45, 0
      %s48 = sadd.s32 %s47, 1
      %s49 = scalar_select %p46, %s47, %s48
      %p52 = pneg %p46
      %p53 = scmp.eq.s32.totalorder %s11, 1
      %p54 = por %p52, %p53
      %p55 = scmp.ne.s32.totalorder %s47, %s50
      %p56 = scmp.eq.s32.totalorder %s11, 0
      %p57 = por %p55, %p56
      %p58 = scmp.ne.s32.totalorder %s47, %s50
      %p59 = scmp.eq.s32.totalorder %s16, 1
      %p60 = por %p58, %p59
      %p61 = scmp.ne.s32.totalorder %s50, %s51
      %p62 = scmp.eq.s32.totalorder %s16, 0
      %p63 = por %p61, %p62
      %p64 = scmp.ne.s32.totalorder %s50, %s51
      %p65 = scmp.eq.s32.totalorder %s17, 1
      %p66 = por %p64, %p65
      %p68 = scmp.ne.s32.totalorder %s51, %s67
      %p69 = scmp.eq.s32.totalorder %s17, 0
      %p70 = por %p68, %p69
      %s72 = sadd.s32 %s71, 1
      %p75 = scmp.eq.s32.totalorder %s11, 1
      %p76 = scmp.ne.s32.totalorder %s71, %s73
      %p77 = scmp.eq.s32.totalorder %s11, 0
      %p78 = por %p76, %p77
      %p79 = scmp.ne.s32.totalorder %s71, %s73
      %p80 = scmp.eq.s32.totalorder %s16, 1
      %p81 = por %p79, %p80
      %p82 = scmp.ne.s32.totalorder %s73, %s74
      %p83 = scmp.eq.s32.totalorder %s16, 0
      %p84 = por %p82, %p83
      %p85 = scmp.ne.s32.totalorder %s73, %s74
      %p86 = scmp.eq.s32.totalorder %s17, 1
      %p87 = por %p85, %p86
      %p89 = scmp.ne.s32.totalorder %s74, %s88
      %p90 = scmp.eq.s32.totalorder %s17, 0
      %p91 = por %p89, %p90
      %s93 = sadd.s32 %s92, 1
      %p96 = scmp.eq.s32.totalorder %s11, 1
      %p97 = scmp.ne.s32.totalorder %s92, %s94
      %p98 = scmp.eq.s32.totalorder %s11, 0
      %p99 = por %p97, %p98
      %p100 = scmp.ne.s32.totalorder %s92, %s94
      %p101 = scmp.eq.s32.totalorder %s16, 1
      %p102 = por %p100, %p101
      %p103 = scmp.ne.s32.totalorder %s94, %s95
      %p104 = scmp.eq.s32.totalorder %s16, 0
      %p105 = por %p103, %p104
      %p106 = scmp.ne.s32.totalorder %s94, %s95
      %p107 = scmp.eq.s32.totalorder %s17, 1
      %p108 = por %p106, %p107
      %p110 = scmp.ne.s32.totalorder %s95, %s109
      %p111 = scmp.eq.s32.totalorder %s17, 0
      %p112 = por %p110, %p111
      %s114 = sadd.s32 %s113, 1
      %p117 = scmp.eq.s32.totalorder %s11, 1
      %p118 = scmp.ne.s32.totalorder %s113, %s115
      %p119 = scmp.eq.s32.totalorder %s11, 0
      %p120 = por %p118, %p119
      %p121 = scmp.ne.s32.totalorder %s113, %s115
      %p122 = scmp.eq.s32.totalorder %s16, 1
      %p123 = por %p121, %p122
      %p124 = scmp.ne.s32.totalorder %s115, %s116
      %p125 = scmp.eq.s32.totalorder %s16, 0
      %p126 = por %p124, %p125
      %p127 = scmp.ne.s32.totalorder %s115, %s116
      %p128 = scmp.eq.s32.totalorder %s17, 1
      %p129 = por %p127, %p128
      %p131 = scmp.ne.s32.totalorder %s116, %s130
      %p132 = scmp.eq.s32.totalorder %s17, 0
      %p133 = por %p131, %p132
      %s134 = ssub.s32 %s11, %s18
      %p135 = scmp.eq.s32.totalorder %s134, 0
      %s137 = sadd.s32 %s136, 1
      %s138 = scalar_select %p135, %s136, %s137
      %p141 = pneg %p135
      %p142 = scmp.eq.s32.totalorder %s11, 1
      %p143 = por %p141, %p142
      %p144 = scmp.ne.s32.totalorder %s136, %s139
      %p145 = scmp.eq.s32.totalorder %s11, 0
      %p146 = por %p144, %p145
      %p147 = scmp.ne.s32.totalorder %s136, %s139
      %p148 = scmp.eq.s32.totalorder %s16, 1
      %p149 = por %p147, %p148
      %p150 = scmp.ne.s32.totalorder %s139, %s140
      %p151 = scmp.eq.s32.totalorder %s16, 0
      %p152 = por %p150, %p151
      %p153 = scmp.ne.s32.totalorder %s139, %s140
      %p154 = scmp.eq.s32.totalorder %s17, 1
      %p155 = por %p153, %p154
      %p157 = scmp.ne.s32.totalorder %s140, %s156
      %p158 = scmp.eq.s32.totalorder %s17, 0
      %p159 = por %p157, %p158
      %p160 = scmp.le.s32.totalorder 1, %s11
      %p161 = scmp.lt.s32.totalorder %s11, 3
      %p162 = pnand %p160, %p161
      %p163 = pneg %p162
      // Predicated region
      $region9: #{res_graph_block1d.1} parent=5 // pred_check
        _
      $region10: #{res_graph_block1d.1} parent=5 // pred_check_branch
        %165 = sbr.rel (%p162) target = $region12
      $region11: #{res_graph_block1d.1} parent=5 // pred_region
        %s166 = ssub.s32 %s11, 1
        // Predicated region
        $region13: #{res_graph_block1d.1} parent=11 // pred_check
          %p167 = pneg %p84
        $region14: #{res_graph_block1d.1} parent=11 // pred_check_branch
          %169 = sbr.rel (%p167) target = $region16
        $region15: #{res_graph_block1d.1} parent=11 // pred_region
          _
        $region16: #{res_graph_block1d.1} parent=11 // pred_fallthru
          _
        // Predicated region
        $region17: #{res_graph_block1d.1} parent=11 // pred_check
          %p170 = pneg %p105
        $region18: #{res_graph_block1d.1} parent=11 // pred_check_branch
          %172 = sbr.rel (%p170) target = $region20
        $region19: #{res_graph_block1d.1} parent=11 // pred_region
          _
        $region20: #{res_graph_block1d.1} parent=11 // pred_fallthru
          _
        // Predicated region
        $region21: #{res_graph_block1d.1} parent=11 // pred_check
          %p173 = pneg %p126
        $region22: #{res_graph_block1d.1} parent=11 // pred_check_branch
          %175 = sbr.rel (%p173) target = $region24
        $region23: #{res_graph_block1d.1} parent=11 // pred_region
          _
        $region24: #{res_graph_block1d.1} parent=11 // pred_fallthru
          _
      $region12: #{res_graph_block1d.1} parent=5 // pred_fallthru
        _
      %p176 = scmp.lt.s32.totalorder %s11, 2
      // Predicated region
      $region25: #{res_graph_block1d.1} parent=5 // pred_check
        %p177 = pneg %p176
      $region26: #{res_graph_block1d.1} parent=5 // pred_check_branch
        %179 = sbr.rel (%p177) target = $region28
      $region27: #{res_graph_block1d.1} parent=5 // pred_region
        // Predicated region
        $region29: #{res_graph_block1d.1} parent=27 // pred_check
          %p180 = pneg %p31
        $region30: #{res_graph_block1d.1} parent=27 // pred_check_branch
          %182 = sbr.rel (%p180) target = $region32
        $region31: #{res_graph_block1d.1} parent=27 // pred_region
          %p183 = scmp.lt.s32.totalorder %s11, 1
          %s184 = scalar_select %p183, %s11, 1
          %s185 = smul.addr %s184, 8
          %s186 = scalar_lea.vmem %s0, %s185
        $region32: #{res_graph_block1d.1} parent=27 // pred_fallthru
          _
        // Predicated region
        $region33: #{res_graph_block1d.1} parent=27 // pred_check
          %p187 = pneg %p57
        $region34: #{res_graph_block1d.1} parent=27 // pred_check_branch
          %189 = sbr.rel (%p187) target = $region36
        $region35: #{res_graph_block1d.1} parent=27 // pred_region
          %s190 = sand.u32 %s47, 1
          %s191 = sand.u32 %s47, 1
          %s192 = smul.addr %s191, 36
          %s193 = scalar_lea.vmem [#allocation2], %s192
          %s194 = smul.addr %s11, 4
          %s195 = scalar_lea.vmem %s1, %s194
          // Predicated region
          $region37: #{res_graph_block1d.1} parent=35 // pred_check
            _
          $region38: #{res_graph_block1d.1} parent=35 // pred_check_branch
            %197 = sbr.rel (0) target = $region40
          $region39: #{res_graph_block1d.1} parent=35 // pred_region
            // Predicated region
            $region41: #{res_graph_block1d.1} parent=39 // pred_check
              _
            $region42: #{res_graph_block1d.1} parent=39 // pred_check_branch
              %199 = sbr.rel target = $region44
            $region43: #{res_graph_block1d.1} parent=39 // pred_region
              // Predicated region
              $region56: #{res_graph_block1d.1} parent=43 // pred_check
                _
              $region57: #{res_graph_block1d.1} parent=43 // pred_check_branch
                %231 = sbr.rel (0) target = $region59
              $region58: #{res_graph_block1d.1} parent=43 // pred_region
                loop: start=0, step=1, limit=1
                $region60: #{res_graph_block1d.1} parent=58 // loop_pre_header
                  _
                $region61: #{res_graph_block1d.1} parent=58 // loop_header
                  %s233 = sphi 0, %s237
                  %p234 = scmp.ge.s32.totalorder %s233, 1
                  %s238 = sphi %s195, %s195
                  %s239 = sphi %s193, %s193
                $region62: #{res_graph_block1d.1} parent=58 // loop_header_branch
                  %236 = sbr.rel (%p234) target = $region66
                $region63: #{res_graph_block1d.1} parent=58 // loop_body
                  _
                $region64: #{res_graph_block1d.1} parent=58 // loop_footer
                  %s237 = sadd.s32 1, %s233
                $region65: #{res_graph_block1d.1} parent=58 // loop_footer_branch
                  %232 = sbr.rel target = $region61
                $region66: #{res_graph_block1d.1} parent=58 // loop_exit
                  _
                %s241 = ssub.s32 16, 1
                loop: start=0, step=1, limit=1
                $region67: #{res_graph_block1d.1} parent=58 // loop_pre_header
                  _
                $region68: #{res_graph_block1d.1} parent=58 // loop_header
                  %s243 = sphi 0, %s247
                  %p244 = scmp.ge.s32.totalorder %s243, 1
                  %s248 = sphi %s195, %s195
                  %s249 = sphi %s193, %s193
                $region69: #{res_graph_block1d.1} parent=58 // loop_header_branch
                  %246 = sbr.rel (%p244) target = $region73
                $region70: #{res_graph_block1d.1} parent=58 // loop_body
                  %v250 = vld [vmem:[%s248] sm:%s241]
                  %251 = vst [vmem:[%s249] sm:%s241] %v250
                  %v252 = vld [vmem:[%s248 + $0x8] sm:%s241]
                  %253 = vst [vmem:[%s249 + $0x4] sm:%s241] %v252
                  %v254 = vld [vmem:[%s248 + $0x10] sm:%s241]
                  %255 = vst [vmem:[%s249 + $0x8] sm:%s241] %v254
                  %v256 = vld [vmem:[%s248 + $0x18] sm:%s241]
                  %257 = vst [vmem:[%s249 + $0xc] sm:%s241] %v256
                  %v258 = vld [vmem:[%s248 + $0x20] sm:%s241]
                  %259 = vst [vmem:[%s249 + $0x10] sm:%s241] %v258
                  %v260 = vld [vmem:[%s248 + $0x28] sm:%s241]
                  %261 = vst [vmem:[%s249 + $0x14] sm:%s241] %v260
                  %v262 = vld [vmem:[%s248 + $0x30] sm:%s241]
                  %263 = vst [vmem:[%s249 + $0x18] sm:%s241] %v262
                  %v264 = vld [vmem:[%s248 + $0x38] sm:%s241]
                  %265 = vst [vmem:[%s249 + $0x1c] sm:%s241] %v264
                  %v266 = vld [vmem:[%s248 + $0x40] sm:%s241]
                  %267 = vst [vmem:[%s249 + $0x20] sm:%s241] %v266
                $region71: #{res_graph_block1d.1} parent=58 // loop_footer
                  %s247 = sadd.s32 1, %s243
                $region72: #{res_graph_block1d.1} parent=58 // loop_footer_branch
                  %242 = sbr.rel target = $region68
                $region73: #{res_graph_block1d.1} parent=58 // loop_exit
                  _
              $region59: #{res_graph_block1d.1} parent=43 // pred_fallthru
                _
            $region44: #{res_graph_block1d.1} parent=39 // pred_fallthru
              _
            // Predicated region
            $region45: #{res_graph_block1d.1} parent=39 // pred_check
              _
            $region46: #{res_graph_block1d.1} parent=39 // pred_check_branch
              %201 = sbr.rel (0) target = $region48
            $region47: #{res_graph_block1d.1} parent=39 // pred_region
              %s203 = ssub.s32 16, 1
              loop: start=0, step=1, limit=1
              $region49: #{res_graph_block1d.1} parent=47 // loop_pre_header
                _
              $region50: #{res_graph_block1d.1} parent=47 // loop_header
                %s205 = sphi 0, %s209
                %p206 = scmp.ge.s32.totalorder %s205, 1
                %s210 = sphi %s195, %s195
                %s211 = sphi %s193, %s193
              $region51: #{res_graph_block1d.1} parent=47 // loop_header_branch
                %208 = sbr.rel (%p206) target = $region55
              $region52: #{res_graph_block1d.1} parent=47 // loop_body
                %v212 = vld [vmem:[%s210] sm:%s203]
                %213 = vst [vmem:[%s211] sm:%s203] %v212
                %v214 = vld [vmem:[%s210 + $0x8] sm:%s203]
                %215 = vst [vmem:[%s211 + $0x4] sm:%s203] %v214
                %v216 = vld [vmem:[%s210 + $0x10] sm:%s203]
                %217 = vst [vmem:[%s211 + $0x8] sm:%s203] %v216
                %v218 = vld [vmem:[%s210 + $0x18] sm:%s203]
                %219 = vst [vmem:[%s211 + $0xc] sm:%s203] %v218
                %v220 = vld [vmem:[%s210 + $0x20] sm:%s203]
                %221 = vst [vmem:[%s211 + $0x10] sm:%s203] %v220
                %v222 = vld [vmem:[%s210 + $0x28] sm:%s203]
                %223 = vst [vmem:[%s211 + $0x14] sm:%s203] %v222
                %v224 = vld [vmem:[%s210 + $0x30] sm:%s203]
                %225 = vst [vmem:[%s211 + $0x18] sm:%s203] %v224
                %v226 = vld [vmem:[%s210 + $0x38] sm:%s203]
                %227 = vst [vmem:[%s211 + $0x1c] sm:%s203] %v226
                %v228 = vld [vmem:[%s210 + $0x40] sm:%s203]
                %229 = vst [vmem:[%s211 + $0x20] sm:%s203] %v228
              $region53: #{res_graph_block1d.1} parent=47 // loop_footer
                %s209 = sadd.s32 1, %s205
              $region54: #{res_graph_block1d.1} parent=47 // loop_footer_branch
                %204 = sbr.rel target = $region50
              $region55: #{res_graph_block1d.1} parent=47 // loop_exit
                _
            $region48: #{res_graph_block1d.1} parent=39 // pred_fallthru
              _
          $region40: #{res_graph_block1d.1} parent=35 // pred_fallthru
            _
          %268 = vnop
        $region36: #{res_graph_block1d.1} parent=27 // pred_fallthru
          _
      $region28: #{res_graph_block1d.1} parent=5 // pred_fallthru
        _
      %p269 = scmp.le.s32.totalorder 1, %s11
      %p270 = scmp.lt.s32.totalorder %s11, 3
      %p271 = pnand %p269, %p270
      %p272 = pneg %p271
      // Predicated region
      $region74: #{res_graph_block1d.1} parent=5 // pred_check
        _
      $region75: #{res_graph_block1d.1} parent=5 // pred_check_branch
        %274 = sbr.rel (%p271) target = $region77
      $region76: #{res_graph_block1d.1} parent=5 // pred_region
        %s275 = ssub.s32 %s11, 1
        %s276 = sand.u32 %s50, 1
        %s277 = sand.u32 %s50, 1
        %s278 = smul.addr %s277, 36
        %s279 = scalar_lea.vmem [#allocation2], %s278
        // Predicated region
        $region78: #{res_graph_block1d.1} parent=76 // pred_check
          %p280 = pneg %p63
        $region79: #{res_graph_block1d.1} parent=76 // pred_check_branch
          %282 = sbr.rel (%p280) target = $region81
        $region80: #{res_graph_block1d.1} parent=76 // pred_region
          _
        $region81: #{res_graph_block1d.1} parent=76 // pred_fallthru
          _
        %p283 = scmp.lt.s32.totalorder %s16, 1
        %s284 = scalar_select %p283, %s16, 1
        %s285 = smul.addr %s284, 8
        %s286 = scalar_lea.vmem %s0, %s285
        %p287 = pneg %p37
        %p288 = pneg %p34
        %s289 = sand.u32 %s50, 1
        %s290 = sand.u32 %s50, 1
        %s291 = smul.addr %s290, 36
        %s292 = scalar_lea.vmem [#allocation2], %s291
        %p293 = pneg %p63
        %p294 = pneg %p60
        %p295 = pneg %p84
        %p296 = pneg %p81
        %p297 = pneg %p105
        %p298 = pneg %p102
        %p299 = pneg %p126
        %p300 = pneg %p123
        %p301 = pneg %p152
        %p302 = pneg %p149
        %p303 = scmp.lt.s32.totalorder %s16, 1
        %s304 = scalar_select %p303, %s16, 1
        %s305 = smul.addr %s304, 8
        %s306 = scalar_lea.vmem %s5, %s305
        %p307 = scmp.lt.s32.totalorder %s16, 1
        %s308 = scalar_select %p307, %s16, 1
        %s309 = smul.addr %s308, 8
        %s310 = scalar_lea.vmem %s0, %s309
        %p311 = scmp.lt.s32.totalorder %s16, 1
        %s312 = scalar_select %p311, %s16, 1
        %s313 = smul.addr %s312, 8
        %s314 = scalar_lea.vmem %s5, %s313
        %v315 = vld [vmem:[%s310] sm:$0xff]
        %v316 = vld [vmem:[%s3] sm:$0xff]
        %v317 = vld [vmem:[%s2] sm:$0xff]
        %v318 = vld [vmem:[%s4] sm:$0xff]
        %320 = vset.pattern.permute.xlu0 0
        %321 = vperm.xlu0 %320, %v318
        %v322 = vpop.permute.xlu0 %321
        %vm324 = vcmask 64512
        %v326 = vsel %vm324, %v317, 0
        %328 = vmatprep.subr.mxu0 0.0
        %329 = vmatpush1.msra.mxu0 0.0
        %330 = vmatprep.subr.mxu0 0.0
        %331 = vmatpush1.msra.mxu0 0.0
        %332 = vmatprep.subr.mxu0 0.0
        %333 = vmatpush1.msra.mxu0 0.0
        %334 = vmatprep.subr.mxu0 0.0
        %335 = vmatpush1.msra.mxu0 0.0
        %336 = vmatprep.subr.mxu0 0.0
        %337 = vmatpush1.msra.mxu0 0.0
        %338 = vmatprep.subr.mxu0 0.0
        %339 = vmatpush1.msra.mxu0 0.0
        %340 = vmatprep.subr.mxu0 0.0
        %341 = vmatpush1.msra.mxu0 0.0
        %342 = vmatprep.subr.mxu0 0.0
        %343 = vmatpush1.msra.mxu0 0.0
        %344 = vmatprep.subr.mxu0 0.0
        %345 = vmatpush1.msra.mxu0 0.0
        %346 = vmatprep.subr.mxu0 0.0
        %347 = vmatpush1.msra.mxu0 0.0
        %348 = vmatprep.subr.mxu0 0.0
        %349 = vmatpush1.msra.mxu0 0.0
        %350 = vmatprep.subr.mxu0 0.0
        %351 = vmatpush1.msra.mxu0 0.0
        %352 = vmatprep.subr.mxu0 0.0
        %353 = vmatpush1.msra.mxu0 0.0
        %354 = vmatprep.subr.mxu0 0.0
        %355 = vmatpush1.msra.mxu0 0.0
        %356 = vmatprep.subr.mxu0 0.0
        %357 = vmatpush1.msra.mxu0 0.0
        %358 = vmatprep.subr.mxu0 0.0
        %359 = vmatpush1.msra.mxu0 %v315
        %360 = vmatprep.subr.mxu0 0.0
        %361 = vmatpush2.msra.mxu0 0.0
        %362 = vmatprep.subr.mxu0 0.0
        %363 = vmatpush2.msra.mxu0 0.0
        %364 = vmatprep.subr.mxu0 0.0
        %365 = vmatpush2.msra.mxu0 0.0
        %366 = vmatprep.subr.mxu0 0.0
        %367 = vmatpush2.msra.mxu0 0.0
        %368 = vmatprep.subr.mxu0 0.0
        %369 = vmatpush2.msra.mxu0 0.0
        %370 = vmatprep.subr.mxu0 0.0
        %371 = vmatpush2.msra.mxu0 0.0
        %372 = vmatprep.subr.mxu0 0.0
        %373 = vmatpush2.msra.mxu0 0.0
        %374 = vmatprep.subr.mxu0 0.0
        %375 = vmatpush2.msra.mxu0 0.0
        %376 = vmatprep.subr.mxu0 0.0
        %377 = vmatpush2.msra.mxu0 0.0
        %378 = vmatprep.subr.mxu0 0.0
        %379 = vmatpush2.msra.mxu0 0.0
        %380 = vmatprep.subr.mxu0 0.0
        %381 = vmatpush2.msra.mxu0 0.0
        %382 = vmatprep.subr.mxu0 0.0
        %383 = vmatpush2.msra.mxu0 0.0
        %384 = vmatprep.subr.mxu0 0.0
        %385 = vmatpush2.msra.mxu0 0.0
        %386 = vmatprep.subr.mxu0 0.0
        %387 = vmatpush2.msra.mxu0 0.0
        %388 = vmatprep.subr.mxu0 0.0
        %389 = vmatpush2.msra.mxu0 0.0
        %390 = vmatprep.subr.mxu0 0.0
        %391 = vmatpush2.msra.mxu0 0.0
        %392 = vmatprep.mubr.f32.mxu0 0.0
        %393 = vmatmul.mubr.f32.gmra.mxu0 %v326
        %v394 = vpop.f32.mrf.mxu0
        %v395 = vadd.f32 %v322, %v394
        %v396 = vpop.f32.mrf.mxu0
        %397 = vdwg.mxu0
        %v398 = vld [vmem:[%s279] sm:$0xf]
        %v399 = vunpack.c.l.bf16 %v398
        %v401 = vsel %vm324, %v316, 0
        %403 = vmatprep.subr.mxu0 0.0
        %404 = vmatpush1.msra.mxu0 0.0
        %405 = vmatprep.subr.mxu0 0.0
        %406 = vmatpush1.msra.mxu0 0.0
        %407 = vmatprep.subr.mxu0 0.0
        %408 = vmatpush1.msra.mxu0 0.0
        %409 = vmatprep.subr.mxu0 0.0
        %410 = vmatpush1.msra.mxu0 0.0
        %411 = vmatprep.subr.mxu0 0.0
        %412 = vmatpush1.msra.mxu0 0.0
        %413 = vmatprep.subr.mxu0 0.0
        %414 = vmatpush1.msra.mxu0 0.0
        %415 = vmatprep.subr.mxu0 0.0
        %416 = vmatpush1.msra.mxu0 0.0
        %417 = vmatprep.subr.mxu0 0.0
        %418 = vmatpush1.msra.mxu0 0.0
        %419 = vmatprep.subr.mxu0 0.0
        %420 = vmatpush1.msra.mxu0 0.0
        %421 = vmatprep.subr.mxu0 0.0
        %422 = vmatpush1.msra.mxu0 0.0
        %423 = vmatprep.subr.mxu0 0.0
        %424 = vmatpush1.msra.mxu0 0.0
        %425 = vmatprep.subr.mxu0 0.0
        %426 = vmatpush1.msra.mxu0 0.0
        %427 = vmatprep.subr.mxu0 0.0
        %428 = vmatpush1.msra.mxu0 0.0
        %429 = vmatprep.subr.mxu0 0.0
        %430 = vmatpush1.msra.mxu0 0.0
        %431 = vmatprep.subr.mxu0 0.0
        %432 = vmatpush1.msra.mxu0 0.0
        %433 = vmatprep.subr.mxu0 0.0
        %434 = vmatpush1.msra.mxu0 %v399
        %435 = vmatprep.subr.mxu0 0.0
        %436 = vmatpush2.msra.mxu0 0.0
        %437 = vmatprep.subr.mxu0 0.0
        %438 = vmatpush2.msra.mxu0 0.0
        %439 = vmatprep.subr.mxu0 0.0
        %440 = vmatpush2.msra.mxu0 0.0
        %441 = vmatprep.subr.mxu0 0.0
        %442 = vmatpush2.msra.mxu0 0.0
        %443 = vmatprep.subr.mxu0 0.0
        %444 = vmatpush2.msra.mxu0 0.0
        %445 = vmatprep.subr.mxu0 0.0
        %446 = vmatpush2.msra.mxu0 0.0
        %447 = vmatprep.subr.mxu0 0.0
        %448 = vmatpush2.msra.mxu0 0.0
        %449 = vmatprep.subr.mxu0 0.0
        %450 = vmatpush2.msra.mxu0 0.0
        %451 = vmatprep.subr.mxu0 0.0
        %452 = vmatpush2.msra.mxu0 0.0
        %453 = vmatprep.subr.mxu0 0.0
        %454 = vmatpush2.msra.mxu0 0.0
        %455 = vmatprep.subr.mxu0 0.0
        %456 = vmatpush2.msra.mxu0 0.0
        %457 = vmatprep.subr.mxu0 0.0
        %458 = vmatpush2.msra.mxu0 0.0
        %459 = vmatprep.subr.mxu0 0.0
        %460 = vmatpush2.msra.mxu0 0.0
        %461 = vmatprep.subr.mxu0 0.0
        %462 = vmatpush2.msra.mxu0 0.0
        %463 = vmatprep.subr.mxu0 0.0
        %464 = vmatpush2.msra.mxu0 0.0
        %465 = vmatprep.subr.mxu0 0.0
        %466 = vmatpush2.msra.mxu0 0.0
        %467 = vmatprep.mubr.f32.mxu0 0.0
        %468 = vmatmul.mubr.f32.gmra.mxu0 %v401
        %v469 = vpop.f32.mrf.mxu0
        %v470 = vadd.f32 0.0, %v469
        %v471 = vpop.f32.mrf.mxu0
        %472 = vdwg.mxu0
        %v473 = vadd.f32 %v395, %v470
        %v474 = vmax.f32 %v473, 0.0
        %s475 = scalar_lea.vmem %s279, 4 [#allocation2]
        %v476 = vld [vmem:[%s475] sm:$0xf]
        %v477 = vunpack.c.l.bf16 %v476
        %478 = vmatprep.subr.mxu0 0.0
        %479 = vmatpush1.msra.mxu0 0.0
        %480 = vmatprep.subr.mxu0 0.0
        %481 = vmatpush1.msra.mxu0 0.0
        %482 = vmatprep.subr.mxu0 0.0
        %483 = vmatpush1.msra.mxu0 0.0
        %484 = vmatprep.subr.mxu0 0.0
        %485 = vmatpush1.msra.mxu0 0.0
        %486 = vmatprep.subr.mxu0 0.0
        %487 = vmatpush1.msra.mxu0 0.0
        %488 = vmatprep.subr.mxu0 0.0
        %489 = vmatpush1.msra.mxu0 0.0
        %490 = vmatprep.subr.mxu0 0.0
        %491 = vmatpush1.msra.mxu0 0.0
        %492 = vmatprep.subr.mxu0 0.0
        %493 = vmatpush1.msra.mxu0 0.0
        %494 = vmatprep.subr.mxu0 0.0
        %495 = vmatpush1.msra.mxu0 0.0
        %496 = vmatprep.subr.mxu0 0.0
        %497 = vmatpush1.msra.mxu0 0.0
        %498 = vmatprep.subr.mxu0 0.0
        %499 = vmatpush1.msra.mxu0 0.0
        %500 = vmatprep.subr.mxu0 0.0
        %501 = vmatpush1.msra.mxu0 0.0
        %502 = vmatprep.subr.mxu0 0.0
        %503 = vmatpush1.msra.mxu0 0.0
        %504 = vmatprep.subr.mxu0 0.0
        %505 = vmatpush1.msra.mxu0 0.0
        %506 = vmatprep.subr.mxu0 0.0
        %507 = vmatpush1.msra.mxu0 0.0
        %508 = vmatprep.subr.mxu0 0.0
        %509 = vmatpush1.msra.mxu0 %v477
        %510 = vmatprep.subr.mxu0 0.0
        %511 = vmatpush2.msra.mxu0 0.0
        %512 = vmatprep.subr.mxu0 0.0
        %513 = vmatpush2.msra.mxu0 0.0
        %514 = vmatprep.subr.mxu0 0.0
        %515 = vmatpush2.msra.mxu0 0.0
        %516 = vmatprep.subr.mxu0 0.0
        %517 = vmatpush2.msra.mxu0 0.0
        %518 = vmatprep.subr.mxu0 0.0
        %519 = vmatpush2.msra.mxu0 0.0
        %520 = vmatprep.subr.mxu0 0.0
        %521 = vmatpush2.msra.mxu0 0.0
        %522 = vmatprep.subr.mxu0 0.0
        %523 = vmatpush2.msra.mxu0 0.0
        %524 = vmatprep.subr.mxu0 0.0
        %525 = vmatpush2.msra.mxu0 0.0
        %526 = vmatprep.subr.mxu0 0.0
        %527 = vmatpush2.msra.mxu0 0.0
        %528 = vmatprep.subr.mxu0 0.0
        %529 = vmatpush2.msra.mxu0 0.0
        %530 = vmatprep.subr.mxu0 0.0
        %531 = vmatpush2.msra.mxu0 0.0
        %532 = vmatprep.subr.mxu0 0.0
        %533 = vmatpush2.msra.mxu0 0.0
        %534 = vmatprep.subr.mxu0 0.0
        %535 = vmatpush2.msra.mxu0 0.0
        %536 = vmatprep.subr.mxu0 0.0
        %537 = vmatpush2.msra.mxu0 0.0
        %538 = vmatprep.subr.mxu0 0.0
        %539 = vmatpush2.msra.mxu0 0.0
        %540 = vmatprep.subr.mxu0 0.0
        %541 = vmatpush2.msra.mxu0 0.0
        %542 = vmatprep.mubr.f32.mxu0 0.0
        %543 = vmatmul.mubr.f32.gmra.mxu0 %v401
        %v544 = vpop.f32.mrf.mxu0
        %v545 = vadd.f32 0.0, %v544
        %v546 = vpop.f32.mrf.mxu0
        %547 = vdwg.mxu0
        %v548 = vadd.f32 %v395, %v545
        %v549 = vmax.f32 %v548, 0.0
        %v550 = vmax.f32 %v474, %v549
        %s551 = scalar_lea.vmem %s279, 8 [#allocation2]
        %v552 = vld [vmem:[%s551] sm:$0xf]
        %v553 = vunpack.c.l.bf16 %v552
        %554 = vmatprep.subr.mxu0 0.0
        %555 = vmatpush1.msra.mxu0 0.0
        %556 = vmatprep.subr.mxu0 0.0
        %557 = vmatpush1.msra.mxu0 0.0
        %558 = vmatprep.subr.mxu0 0.0
        %559 = vmatpush1.msra.mxu0 0.0
        %560 = vmatprep.subr.mxu0 0.0
        %561 = vmatpush1.msra.mxu0 0.0
        %562 = vmatprep.subr.mxu0 0.0
        %563 = vmatpush1.msra.mxu0 0.0
        %564 = vmatprep.subr.mxu0 0.0
        %565 = vmatpush1.msra.mxu0 0.0
        %566 = vmatprep.subr.mxu0 0.0
        %567 = vmatpush1.msra.mxu0 0.0
        %568 = vmatprep.subr.mxu0 0.0
        %569 = vmatpush1.msra.mxu0 0.0
        %570 = vmatprep.subr.mxu0 0.0
        %571 = vmatpush1.msra.mxu0 0.0
        %572 = vmatprep.subr.mxu0 0.0
        %573 = vmatpush1.msra.mxu0 0.0
        %574 = vmatprep.subr.mxu0 0.0
        %575 = vmatpush1.msra.mxu0 0.0
        %576 = vmatprep.subr.mxu0 0.0
        %577 = vmatpush1.msra.mxu0 0.0
        %578 = vmatprep.subr.mxu0 0.0
        %579 = vmatpush1.msra.mxu0 0.0
        %580 = vmatprep.subr.mxu0 0.0
        %581 = vmatpush1.msra.mxu0 0.0
        %582 = vmatprep.subr.mxu0 0.0
        %583 = vmatpush1.msra.mxu0 0.0
        %584 = vmatprep.subr.mxu0 0.0
        %585 = vmatpush1.msra.mxu0 %v553
        %586 = vmatprep.subr.mxu0 0.0
        %587 = vmatpush2.msra.mxu0 0.0
        %588 = vmatprep.subr.mxu0 0.0
        %589 = vmatpush2.msra.mxu0 0.0
        %590 = vmatprep.subr.mxu0 0.0
        %591 = vmatpush2.msra.mxu0 0.0
        %592 = vmatprep.subr.mxu0 0.0
        %593 = vmatpush2.msra.mxu0 0.0
        %594 = vmatprep.subr.mxu0 0.0
        %595 = vmatpush2.msra.mxu0 0.0
        %596 = vmatprep.subr.mxu0 0.0
        %597 = vmatpush2.msra.mxu0 0.0
        %598 = vmatprep.subr.mxu0 0.0
        %599 = vmatpush2.msra.mxu0 0.0
        %600 = vmatprep.subr.mxu0 0.0
        %601 = vmatpush2.msra.mxu0 0.0
        %602 = vmatprep.subr.mxu0 0.0
        %603 = vmatpush2.msra.mxu0 0.0
        %604 = vmatprep.subr.mxu0 0.0
        %605 = vmatpush2.msra.mxu0 0.0
        %606 = vmatprep.subr.mxu0 0.0
        %607 = vmatpush2.msra.mxu0 0.0
        %608 = vmatprep.subr.mxu0 0.0
        %609 = vmatpush2.msra.mxu0 0.0
        %610 = vmatprep.subr.mxu0 0.0
        %611 = vmatpush2.msra.mxu0 0.0
        %612 = vmatprep.subr.mxu0 0.0
        %613 = vmatpush2.msra.mxu0 0.0
        %614 = vmatprep.subr.mxu0 0.0
        %615 = vmatpush2.msra.mxu0 0.0
        %616 = vmatprep.subr.mxu0 0.0
        %617 = vmatpush2.msra.mxu0 0.0
        %618 = vmatprep.mubr.f32.mxu0 0.0
        %619 = vmatmul.mubr.f32.gmra.mxu0 %v401
        %v620 = vpop.f32.mrf.mxu0
        %v621 = vadd.f32 0.0, %v620
        %v622 = vpop.f32.mrf.mxu0
        %623 = vdwg.mxu0
        %v624 = vadd.f32 %v395, %v621
        %v625 = vmax.f32 %v624, 0.0
        %v626 = vmax.f32 %v550, %v625
        %s627 = scalar_lea.vmem %s279, 12 [#allocation2]
        %v628 = vld [vmem:[%s627] sm:$0xf]
        %v629 = vunpack.c.l.bf16 %v628
        %630 = vmatprep.subr.mxu0 0.0
        %631 = vmatpush1.msra.mxu0 0.0
        %632 = vmatprep.subr.mxu0 0.0
        %633 = vmatpush1.msra.mxu0 0.0
        %634 = vmatprep.subr.mxu0 0.0
        %635 = vmatpush1.msra.mxu0 0.0
        %636 = vmatprep.subr.mxu0 0.0
        %637 = vmatpush1.msra.mxu0 0.0
        %638 = vmatprep.subr.mxu0 0.0
        %639 = vmatpush1.msra.mxu0 0.0
        %640 = vmatprep.subr.mxu0 0.0
        %641 = vmatpush1.msra.mxu0 0.0
        %642 = vmatprep.subr.mxu0 0.0
        %643 = vmatpush1.msra.mxu0 0.0
        %644 = vmatprep.subr.mxu0 0.0
        %645 = vmatpush1.msra.mxu0 0.0
        %646 = vmatprep.subr.mxu0 0.0
        %647 = vmatpush1.msra.mxu0 0.0
        %648 = vmatprep.subr.mxu0 0.0
        %649 = vmatpush1.msra.mxu0 0.0
        %650 = vmatprep.subr.mxu0 0.0
        %651 = vmatpush1.msra.mxu0 0.0
        %652 = vmatprep.subr.mxu0 0.0
        %653 = vmatpush1.msra.mxu0 0.0
        %654 = vmatprep.subr.mxu0 0.0
        %655 = vmatpush1.msra.mxu0 0.0
        %656 = vmatprep.subr.mxu0 0.0
        %657 = vmatpush1.msra.mxu0 0.0
        %658 = vmatprep.subr.mxu0 0.0
        %659 = vmatpush1.msra.mxu0 0.0
        %660 = vmatprep.subr.mxu0 0.0
        %661 = vmatpush1.msra.mxu0 %v629
        %662 = vmatprep.subr.mxu0 0.0
        %663 = vmatpush2.msra.mxu0 0.0
        %664 = vmatprep.subr.mxu0 0.0
        %665 = vmatpush2.msra.mxu0 0.0
        %666 = vmatprep.subr.mxu0 0.0
        %667 = vmatpush2.msra.mxu0 0.0
        %668 = vmatprep.subr.mxu0 0.0
        %669 = vmatpush2.msra.mxu0 0.0
        %670 = vmatprep.subr.mxu0 0.0
        %671 = vmatpush2.msra.mxu0 0.0
        %672 = vmatprep.subr.mxu0 0.0
        %673 = vmatpush2.msra.mxu0 0.0
        %674 = vmatprep.subr.mxu0 0.0
        %675 = vmatpush2.msra.mxu0 0.0
        %676 = vmatprep.subr.mxu0 0.0
        %677 = vmatpush2.msra.mxu0 0.0
        %678 = vmatprep.subr.mxu0 0.0
        %679 = vmatpush2.msra.mxu0 0.0
        %680 = vmatprep.subr.mxu0 0.0
        %681 = vmatpush2.msra.mxu0 0.0
        %682 = vmatprep.subr.mxu0 0.0
        %683 = vmatpush2.msra.mxu0 0.0
        %684 = vmatprep.subr.mxu0 0.0
        %685 = vmatpush2.msra.mxu0 0.0
        %686 = vmatprep.subr.mxu0 0.0
        %687 = vmatpush2.msra.mxu0 0.0
        %688 = vmatprep.subr.mxu0 0.0
        %689 = vmatpush2.msra.mxu0 0.0
        %690 = vmatprep.subr.mxu0 0.0
        %691 = vmatpush2.msra.mxu0 0.0
        %692 = vmatprep.subr.mxu0 0.0
        %693 = vmatpush2.msra.mxu0 0.0
        %694 = vmatprep.mubr.f32.mxu0 0.0
        %695 = vmatmul.mubr.f32.gmra.mxu0 %v401
        %v696 = vpop.f32.mrf.mxu0
        %v697 = vadd.f32 0.0, %v696
        %v698 = vpop.f32.mrf.mxu0
        %699 = vdwg.mxu0
        %v700 = vadd.f32 %v395, %v697
        %v701 = vmax.f32 %v700, 0.0
        %v702 = vmax.f32 %v626, %v701
        %s703 = scalar_lea.vmem %s279, 16 [#allocation2]
        %v704 = vld [vmem:[%s703] sm:$0xf]
        %v705 = vunpack.c.l.bf16 %v704
        %706 = vmatprep.subr.mxu0 0.0
        %707 = vmatpush1.msra.mxu0 0.0
        %708 = vmatprep.subr.mxu0 0.0
        %709 = vmatpush1.msra.mxu0 0.0
        %710 = vmatprep.subr.mxu0 0.0
        %711 = vmatpush1.msra.mxu0 0.0
        %712 = vmatprep.subr.mxu0 0.0
        %713 = vmatpush1.msra.mxu0 0.0
        %714 = vmatprep.subr.mxu0 0.0
        %715 = vmatpush1.msra.mxu0 0.0
        %716 = vmatprep.subr.mxu0 0.0
        %717 = vmatpush1.msra.mxu0 0.0
        %718 = vmatprep.subr.mxu0 0.0
        %719 = vmatpush1.msra.mxu0 0.0
        %720 = vmatprep.subr.mxu0 0.0
        %721 = vmatpush1.msra.mxu0 0.0
        %722 = vmatprep.subr.mxu0 0.0
        %723 = vmatpush1.msra.mxu0 0.0
        %724 = vmatprep.subr.mxu0 0.0
        %725 = vmatpush1.msra.mxu0 0.0
        %726 = vmatprep.subr.mxu0 0.0
        %727 = vmatpush1.msra.mxu0 0.0
        %728 = vmatprep.subr.mxu0 0.0
        %729 = vmatpush1.msra.mxu0 0.0
        %730 = vmatprep.subr.mxu0 0.0
        %731 = vmatpush1.msra.mxu0 0.0
        %732 = vmatprep.subr.mxu0 0.0
        %733 = vmatpush1.msra.mxu0 0.0
        %734 = vmatprep.subr.mxu0 0.0
        %735 = vmatpush1.msra.mxu0 0.0
        %736 = vmatprep.subr.mxu0 0.0
        %737 = vmatpush1.msra.mxu0 %v705
        %738 = vmatprep.subr.mxu0 0.0
        %739 = vmatpush2.msra.mxu0 0.0
        %740 = vmatprep.subr.mxu0 0.0
        %741 = vmatpush2.msra.mxu0 0.0
        %742 = vmatprep.subr.mxu0 0.0
        %743 = vmatpush2.msra.mxu0 0.0
        %744 = vmatprep.subr.mxu0 0.0
        %745 = vmatpush2.msra.mxu0 0.0
        %746 = vmatprep.subr.mxu0 0.0
        %747 = vmatpush2.msra.mxu0 0.0
        %748 = vmatprep.subr.mxu0 0.0
        %749 = vmatpush2.msra.mxu0 0.0
        %750 = vmatprep.subr.mxu0 0.0
        %751 = vmatpush2.msra.mxu0 0.0
        %752 = vmatprep.subr.mxu0 0.0
        %753 = vmatpush2.msra.mxu0 0.0
        %754 = vmatprep.subr.mxu0 0.0
        %755 = vmatpush2.msra.mxu0 0.0
        %756 = vmatprep.subr.mxu0 0.0
        %757 = vmatpush2.msra.mxu0 0.0
        %758 = vmatprep.subr.mxu0 0.0
        %759 = vmatpush2.msra.mxu0 0.0
        %760 = vmatprep.subr.mxu0 0.0
        %761 = vmatpush2.msra.mxu0 0.0
        %762 = vmatprep.subr.mxu0 0.0
        %763 = vmatpush2.msra.mxu0 0.0
        %764 = vmatprep.subr.mxu0 0.0
        %765 = vmatpush2.msra.mxu0 0.0
        %766 = vmatprep.subr.mxu0 0.0
        %767 = vmatpush2.msra.mxu0 0.0
        %768 = vmatprep.subr.mxu0 0.0
        %769 = vmatpush2.msra.mxu0 0.0
        %770 = vmatprep.mubr.f32.mxu0 0.0
        %771 = vmatmul.mubr.f32.gmra.mxu0 %v401
        %v772 = vpop.f32.mrf.mxu0
        %v773 = vadd.f32 0.0, %v772
        %v774 = vpop.f32.mrf.mxu0
        %775 = vdwg.mxu0
        %v776 = vadd.f32 %v395, %v773
        %v777 = vmax.f32 %v776, 0.0
        %v778 = vmax.f32 %v702, %v777
        %s779 = scalar_lea.vmem %s279, 20 [#allocation2]
        %v780 = vld [vmem:[%s779] sm:$0xf]
        %v781 = vunpack.c.l.bf16 %v780
        %782 = vmatprep.subr.mxu0 0.0
        %783 = vmatpush1.msra.mxu0 0.0
        %784 = vmatprep.subr.mxu0 0.0
        %785 = vmatpush1.msra.mxu0 0.0
        %786 = vmatprep.subr.mxu0 0.0
        %787 = vmatpush1.msra.mxu0 0.0
        %788 = vmatprep.subr.mxu0 0.0
        %789 = vmatpush1.msra.mxu0 0.0
        %790 = vmatprep.subr.mxu0 0.0
        %791 = vmatpush1.msra.mxu0 0.0
        %792 = vmatprep.subr.mxu0 0.0
        %793 = vmatpush1.msra.mxu0 0.0
        %794 = vmatprep.subr.mxu0 0.0
        %795 = vmatpush1.msra.mxu0 0.0
        %796 = vmatprep.subr.mxu0 0.0
        %797 = vmatpush1.msra.mxu0 0.0
        %798 = vmatprep.subr.mxu0 0.0
        %799 = vmatpush1.msra.mxu0 0.0
        %800 = vmatprep.subr.mxu0 0.0
        %801 = vmatpush1.msra.mxu0 0.0
        %802 = vmatprep.subr.mxu0 0.0
        %803 = vmatpush1.msra.mxu0 0.0
        %804 = vmatprep.subr.mxu0 0.0
        %805 = vmatpush1.msra.mxu0 0.0
        %806 = vmatprep.subr.mxu0 0.0
        %807 = vmatpush1.msra.mxu0 0.0
        %808 = vmatprep.subr.mxu0 0.0
        %809 = vmatpush1.msra.mxu0 0.0
        %810 = vmatprep.subr.mxu0 0.0
        %811 = vmatpush1.msra.mxu0 0.0
        %812 = vmatprep.subr.mxu0 0.0
        %813 = vmatpush1.msra.mxu0 %v781
        %814 = vmatprep.subr.mxu0 0.0
        %815 = vmatpush2.msra.mxu0 0.0
        %816 = vmatprep.subr.mxu0 0.0
        %817 = vmatpush2.msra.mxu0 0.0
        %818 = vmatprep.subr.mxu0 0.0
        %819 = vmatpush2.msra.mxu0 0.0
        %820 = vmatprep.subr.mxu0 0.0
        %821 = vmatpush2.msra.mxu0 0.0
        %822 = vmatprep.subr.mxu0 0.0
        %823 = vmatpush2.msra.mxu0 0.0
        %824 = vmatprep.subr.mxu0 0.0
        %825 = vmatpush2.msra.mxu0 0.0
        %826 = vmatprep.subr.mxu0 0.0
        %827 = vmatpush2.msra.mxu0 0.0
        %828 = vmatprep.subr.mxu0 0.0
        %829 = vmatpush2.msra.mxu0 0.0
        %830 = vmatprep.subr.mxu0 0.0
        %831 = vmatpush2.msra.mxu0 0.0
        %832 = vmatprep.subr.mxu0 0.0
        %833 = vmatpush2.msra.mxu0 0.0
        %834 = vmatprep.subr.mxu0 0.0
        %835 = vmatpush2.msra.mxu0 0.0
        %836 = vmatprep.subr.mxu0 0.0
        %837 = vmatpush2.msra.mxu0 0.0
        %838 = vmatprep.subr.mxu0 0.0
        %839 = vmatpush2.msra.mxu0 0.0
        %840 = vmatprep.subr.mxu0 0.0
        %841 = vmatpush2.msra.mxu0 0.0
        %842 = vmatprep.subr.mxu0 0.0
        %843 = vmatpush2.msra.mxu0 0.0
        %844 = vmatprep.subr.mxu0 0.0
        %845 = vmatpush2.msra.mxu0 0.0
        %846 = vmatprep.mubr.f32.mxu0 0.0
        %847 = vmatmul.mubr.f32.gmra.mxu0 %v401
        %v848 = vpop.f32.mrf.mxu0
        %v849 = vadd.f32 0.0, %v848
        %v850 = vpop.f32.mrf.mxu0
        %851 = vdwg.mxu0
        %v852 = vadd.f32 %v395, %v849
        %v853 = vmax.f32 %v852, 0.0
        %v854 = vmax.f32 %v778, %v853
        %s855 = scalar_lea.vmem %s279, 24 [#allocation2]
        %v856 = vld [vmem:[%s855] sm:$0xf]
        %v857 = vunpack.c.l.bf16 %v856
        %858 = vmatprep.subr.mxu0 0.0
        %859 = vmatpush1.msra.mxu0 0.0
        %860 = vmatprep.subr.mxu0 0.0
        %861 = vmatpush1.msra.mxu0 0.0
        %862 = vmatprep.subr.mxu0 0.0
        %863 = vmatpush1.msra.mxu0 0.0
        %864 = vmatprep.subr.mxu0 0.0
        %865 = vmatpush1.msra.mxu0 0.0
        %866 = vmatprep.subr.mxu0 0.0
        %867 = vmatpush1.msra.mxu0 0.0
        %868 = vmatprep.subr.mxu0 0.0
        %869 = vmatpush1.msra.mxu0 0.0
        %870 = vmatprep.subr.mxu0 0.0
        %871 = vmatpush1.msra.mxu0 0.0
        %872 = vmatprep.subr.mxu0 0.0
        %873 = vmatpush1.msra.mxu0 0.0
        %874 = vmatprep.subr.mxu0 0.0
        %875 = vmatpush1.msra.mxu0 0.0
        %876 = vmatprep.subr.mxu0 0.0
        %877 = vmatpush1.msra.mxu0 0.0
        %878 = vmatprep.subr.mxu0 0.0
        %879 = vmatpush1.msra.mxu0 0.0
        %880 = vmatprep.subr.mxu0 0.0
        %881 = vmatpush1.msra.mxu0 0.0
        %882 = vmatprep.subr.mxu0 0.0
        %883 = vmatpush1.msra.mxu0 0.0
        %884 = vmatprep.subr.mxu0 0.0
        %885 = vmatpush1.msra.mxu0 0.0
        %886 = vmatprep.subr.mxu0 0.0
        %887 = vmatpush1.msra.mxu0 0.0
        %888 = vmatprep.subr.mxu0 0.0
        %889 = vmatpush1.msra.mxu0 %v857
        %890 = vmatprep.subr.mxu0 0.0
        %891 = vmatpush2.msra.mxu0 0.0
        %892 = vmatprep.subr.mxu0 0.0
        %893 = vmatpush2.msra.mxu0 0.0
        %894 = vmatprep.subr.mxu0 0.0
        %895 = vmatpush2.msra.mxu0 0.0
        %896 = vmatprep.subr.mxu0 0.0
        %897 = vmatpush2.msra.mxu0 0.0
        %898 = vmatprep.subr.mxu0 0.0
        %899 = vmatpush2.msra.mxu0 0.0
        %900 = vmatprep.subr.mxu0 0.0
        %901 = vmatpush2.msra.mxu0 0.0
        %902 = vmatprep.subr.mxu0 0.0
        %903 = vmatpush2.msra.mxu0 0.0
        %904 = vmatprep.subr.mxu0 0.0
        %905 = vmatpush2.msra.mxu0 0.0
        %906 = vmatprep.subr.mxu0 0.0
        %907 = vmatpush2.msra.mxu0 0.0
        %908 = vmatprep.subr.mxu0 0.0
        %909 = vmatpush2.msra.mxu0 0.0
        %910 = vmatprep.subr.mxu0 0.0
        %911 = vmatpush2.msra.mxu0 0.0
        %912 = vmatprep.subr.mxu0 0.0
        %913 = vmatpush2.msra.mxu0 0.0
        %914 = vmatprep.subr.mxu0 0.0
        %915 = vmatpush2.msra.mxu0 0.0
        %916 = vmatprep.subr.mxu0 0.0
        %917 = vmatpush2.msra.mxu0 0.0
        %918 = vmatprep.subr.mxu0 0.0
        %919 = vmatpush2.msra.mxu0 0.0
        %920 = vmatprep.subr.mxu0 0.0
        %921 = vmatpush2.msra.mxu0 0.0
        %922 = vmatprep.mubr.f32.mxu0 0.0
        %923 = vmatmul.mubr.f32.gmra.mxu0 %v401
        %v924 = vpop.f32.mrf.mxu0
        %v925 = vadd.f32 0.0, %v924
        %v926 = vpop.f32.mrf.mxu0
        %927 = vdwg.mxu0
        %v928 = vadd.f32 %v395, %v925
        %v929 = vmax.f32 %v928, 0.0
        %v930 = vmax.f32 %v854, %v929
        %s931 = scalar_lea.vmem %s279, 28 [#allocation2]
        %v932 = vld [vmem:[%s931] sm:$0xf]
        %v933 = vunpack.c.l.bf16 %v932
        %934 = vmatprep.subr.mxu0 0.0
        %935 = vmatpush1.msra.mxu0 0.0
        %936 = vmatprep.subr.mxu0 0.0
        %937 = vmatpush1.msra.mxu0 0.0
        %938 = vmatprep.subr.mxu0 0.0
        %939 = vmatpush1.msra.mxu0 0.0
        %940 = vmatprep.subr.mxu0 0.0
        %941 = vmatpush1.msra.mxu0 0.0
        %942 = vmatprep.subr.mxu0 0.0
        %943 = vmatpush1.msra.mxu0 0.0
        %944 = vmatprep.subr.mxu0 0.0
        %945 = vmatpush1.msra.mxu0 0.0
        %946 = vmatprep.subr.mxu0 0.0
        %947 = vmatpush1.msra.mxu0 0.0
        %948 = vmatprep.subr.mxu0 0.0
        %949 = vmatpush1.msra.mxu0 0.0
        %950 = vmatprep.subr.mxu0 0.0
        %951 = vmatpush1.msra.mxu0 0.0
        %952 = vmatprep.subr.mxu0 0.0
        %953 = vmatpush1.msra.mxu0 0.0
        %954 = vmatprep.subr.mxu0 0.0
        %955 = vmatpush1.msra.mxu0 0.0
        %956 = vmatprep.subr.mxu0 0.0
        %957 = vmatpush1.msra.mxu0 0.0
        %958 = vmatprep.subr.mxu0 0.0
        %959 = vmatpush1.msra.mxu0 0.0
        %960 = vmatprep.subr.mxu0 0.0
        %961 = vmatpush1.msra.mxu0 0.0
        %962 = vmatprep.subr.mxu0 0.0
        %963 = vmatpush1.msra.mxu0 0.0
        %964 = vmatprep.subr.mxu0 0.0
        %965 = vmatpush1.msra.mxu0 %v933
        %966 = vmatprep.subr.mxu0 0.0
        %967 = vmatpush2.msra.mxu0 0.0
        %968 = vmatprep.subr.mxu0 0.0
        %969 = vmatpush2.msra.mxu0 0.0
        %970 = vmatprep.subr.mxu0 0.0
        %971 = vmatpush2.msra.mxu0 0.0
        %972 = vmatprep.subr.mxu0 0.0
        %973 = vmatpush2.msra.mxu0 0.0
        %974 = vmatprep.subr.mxu0 0.0
        %975 = vmatpush2.msra.mxu0 0.0
        %976 = vmatprep.subr.mxu0 0.0
        %977 = vmatpush2.msra.mxu0 0.0
        %978 = vmatprep.subr.mxu0 0.0
        %979 = vmatpush2.msra.mxu0 0.0
        %980 = vmatprep.subr.mxu0 0.0
        %981 = vmatpush2.msra.mxu0 0.0
        %982 = vmatprep.subr.mxu0 0.0
        %983 = vmatpush2.msra.mxu0 0.0
        %984 = vmatprep.subr.mxu0 0.0
        %985 = vmatpush2.msra.mxu0 0.0
        %986 = vmatprep.subr.mxu0 0.0
        %987 = vmatpush2.msra.mxu0 0.0
        %988 = vmatprep.subr.mxu0 0.0
        %989 = vmatpush2.msra.mxu0 0.0
        %990 = vmatprep.subr.mxu0 0.0
        %991 = vmatpush2.msra.mxu0 0.0
        %992 = vmatprep.subr.mxu0 0.0
        %993 = vmatpush2.msra.mxu0 0.0
        %994 = vmatprep.subr.mxu0 0.0
        %995 = vmatpush2.msra.mxu0 0.0
        %996 = vmatprep.subr.mxu0 0.0
        %997 = vmatpush2.msra.mxu0 0.0
        %998 = vmatprep.mubr.f32.mxu0 0.0
        %999 = vmatmul.mubr.f32.gmra.mxu0 %v401
        %v1000 = vpop.f32.mrf.mxu0
        %v1001 = vadd.f32 0.0, %v1000
        %v1002 = vpop.f32.mrf.mxu0
        %1003 = vdwg.mxu0
        %v1004 = vadd.f32 %v395, %v1001
        %v1005 = vmax.f32 %v1004, 0.0
        %v1006 = vmax.f32 %v930, %v1005
        %s1007 = scalar_lea.vmem %s279, 32 [#allocation2]
        %v1008 = vld [vmem:[%s1007] sm:$0xf]
        %v1009 = vunpack.c.l.bf16 %v1008
        %1010 = vmatprep.subr.mxu0 0.0
        %1011 = vmatpush1.msra.mxu0 0.0
        %1012 = vmatprep.subr.mxu0 0.0
        %1013 = vmatpush1.msra.mxu0 0.0
        %1014 = vmatprep.subr.mxu0 0.0
        %1015 = vmatpush1.msra.mxu0 0.0
        %1016 = vmatprep.subr.mxu0 0.0
        %1017 = vmatpush1.msra.mxu0 0.0
        %1018 = vmatprep.subr.mxu0 0.0
        %1019 = vmatpush1.msra.mxu0 0.0
        %1020 = vmatprep.subr.mxu0 0.0
        %1021 = vmatpush1.msra.mxu0 0.0
        %1022 = vmatprep.subr.mxu0 0.0
        %1023 = vmatpush1.msra.mxu0 0.0
        %1024 = vmatprep.subr.mxu0 0.0
        %1025 = vmatpush1.msra.mxu0 0.0
        %1026 = vmatprep.subr.mxu0 0.0
        %1027 = vmatpush1.msra.mxu0 0.0
        %1028 = vmatprep.subr.mxu0 0.0
        %1029 = vmatpush1.msra.mxu0 0.0
        %1030 = vmatprep.subr.mxu0 0.0
        %1031 = vmatpush1.msra.mxu0 0.0
        %1032 = vmatprep.subr.mxu0 0.0
        %1033 = vmatpush1.msra.mxu0 0.0
        %1034 = vmatprep.subr.mxu0 0.0
        %1035 = vmatpush1.msra.mxu0 0.0
        %1036 = vmatprep.subr.mxu0 0.0
        %1037 = vmatpush1.msra.mxu0 0.0
        %1038 = vmatprep.subr.mxu0 0.0
        %1039 = vmatpush1.msra.mxu0 0.0
        %1040 = vmatprep.subr.mxu0 0.0
        %1041 = vmatpush1.msra.mxu0 %v1009
        %1042 = vmatprep.subr.mxu0 0.0
        %1043 = vmatpush2.msra.mxu0 0.0
        %1044 = vmatprep.subr.mxu0 0.0
        %1045 = vmatpush2.msra.mxu0 0.0
        %1046 = vmatprep.subr.mxu0 0.0
        %1047 = vmatpush2.msra.mxu0 0.0
        %1048 = vmatprep.subr.mxu0 0.0
        %1049 = vmatpush2.msra.mxu0 0.0
        %1050 = vmatprep.subr.mxu0 0.0
        %1051 = vmatpush2.msra.mxu0 0.0
        %1052 = vmatprep.subr.mxu0 0.0
        %1053 = vmatpush2.msra.mxu0 0.0
        %1054 = vmatprep.subr.mxu0 0.0
        %1055 = vmatpush2.msra.mxu0 0.0
        %1056 = vmatprep.subr.mxu0 0.0
        %1057 = vmatpush2.msra.mxu0 0.0
        %1058 = vmatprep.subr.mxu0 0.0
        %1059 = vmatpush2.msra.mxu0 0.0
        %1060 = vmatprep.subr.mxu0 0.0
        %1061 = vmatpush2.msra.mxu0 0.0
        %1062 = vmatprep.subr.mxu0 0.0
        %1063 = vmatpush2.msra.mxu0 0.0
        %1064 = vmatprep.subr.mxu0 0.0
        %1065 = vmatpush2.msra.mxu0 0.0
        %1066 = vmatprep.subr.mxu0 0.0
        %1067 = vmatpush2.msra.mxu0 0.0
        %1068 = vmatprep.subr.mxu0 0.0
        %1069 = vmatpush2.msra.mxu0 0.0
        %1070 = vmatprep.subr.mxu0 0.0
        %1071 = vmatpush2.msra.mxu0 0.0
        %1072 = vmatprep.subr.mxu0 0.0
        %1073 = vmatpush2.msra.mxu0 0.0
        %1074 = vmatprep.mubr.f32.mxu0 0.0
        %1075 = vmatmul.mubr.f32.gmra.mxu0 %v401
        %v1076 = vpop.f32.mrf.mxu0
        %v1077 = vadd.f32 0.0, %v1076
        %v1078 = vpop.f32.mrf.mxu0
        %1079 = vdwg.mxu0
        %v1080 = vadd.f32 %v395, %v1077
        %v1081 = vmax.f32 %v1080, 0.0
        %v1082 = vmax.f32 %v1006, %v1081
        %v1083 = vadd.f32 %v1082, %v315
        %1084 = vst [vmem:[%s314] sm:$0xff] %v1083
        %p1085 = scmp.lt.s32.totalorder %s16, 1
        %s1086 = scalar_select %p1085, %s16, 1
        %s1087 = smul.addr %s1086, 8
        %s1088 = scalar_lea.vmem %s5, %s1087
        // Predicated region
        $region82: #{res_graph_block1d.1} parent=76 // pred_check
          %p1089 = pneg %p149
        $region83: #{res_graph_block1d.1} parent=76 // pred_check_branch
          %1091 = sbr.rel (%p1089) target = $region85
        $region84: #{res_graph_block1d.1} parent=76 // pred_region
          _
        $region85: #{res_graph_block1d.1} parent=76 // pred_fallthru
          _
      $region77: #{res_graph_block1d.1} parent=5 // pred_fallthru
        _
      %p1092 = scmp.le.s32.totalorder 2, %s11
      // Predicated region
      $region86: #{res_graph_block1d.1} parent=5 // pred_check
        %p1093 = pneg %p1092
      $region87: #{res_graph_block1d.1} parent=5 // pred_check_branch
        %1095 = sbr.rel (%p1093) target = $region89
      $region88: #{res_graph_block1d.1} parent=5 // pred_region
        %s1096 = ssub.s32 %s11, 2
        // Predicated region
        $region90: #{res_graph_block1d.1} parent=88 // pred_check
          %p1097 = pneg %p155
        $region91: #{res_graph_block1d.1} parent=88 // pred_check_branch
          %1099 = sbr.rel (%p1097) target = $region93
        $region92: #{res_graph_block1d.1} parent=88 // pred_region
          %p1100 = scmp.lt.s32.totalorder %s17, 1
          %s1101 = scalar_select %p1100, %s17, 1
          %s1102 = smul.addr %s1101, 8
          %s1103 = scalar_lea.vmem %s5, %s1102
        $region93: #{res_graph_block1d.1} parent=88 // pred_fallthru
          _
      $region89: #{res_graph_block1d.1} parent=5 // pred_fallthru
        _
    $region6: #{res_graph_block1d.1} parent=1 // loop_footer
      %s15 = sadd.s32 1, %s11
    $region7: #{res_graph_block1d.1} parent=1 // loop_footer_branch
      %10 = sbr.rel target = $region3
    $region8: #{res_graph_block1d.1} parent=1 // loop_exit
      _

</llo_original>
